<compile_context>
chip_gen: v7x
topology: tpu7x:2x2x1
jax: 0.10.0
libtpu: 0.0.40
codegen_flags: <defaults>
</compile_context>

<pallas_src>
import math
import jax
import jax.numpy as jnp
from jax.experimental import pallas as pl
from jax.experimental.pallas import tpu as pltpu


def _decoder_seq_kernel(x_ref, wx_ref, wh_ref, b_ref, h0_ref, c0_ref,
                        h_all_ref, c_all_ref):
    """Run T decoder-cell steps fully inside one kernel (state stays in VMEM).

    x_ref    : (T*B, P)   all timestep inputs, time-major then batch
    wx_ref   : (P, 4H)    stacked input->gate weights  [fl | il | ol | Cl]
    wh_ref   : (H, 4H)    stacked hidden->gate weights [fl | il | ol | Cl]
    b_ref    : (1, 4H)    stacked biases
    h0_ref   : (B, H)     initial hidden state
    c0_ref   : (B, H)     initial cell state
    h_all_ref: (B, T*H)   hidden state of every step (lane-dense slab)
    c_all_ref: (B, T*H)   cell   state of every step (lane-dense slab)
    """
    B, H = h0_ref.shape
    T = h_all_ref.shape[1] // H
    cdt = wx_ref.dtype  # MXU operand dtype (f32, or bf16 on v6e/v7x)

    # Input-gate contribution for every timestep in ONE MXU matmul, with the
    # bias folded in via a single hoisted broadcast-add (not per step).
    xw_all = jnp.dot(x_ref[...].astype(cdt), wx_ref[...],
                     preferred_element_type=jnp.float32) + b_ref[...]

    wh = wh_ref[...]
    h = h0_ref[...]
    c = c0_ref[...]
    h_steps = []
    c_steps = []
    # T is small and static: a full unroll keeps h/c in vregs and lets the
    # scheduler interleave the tiny recurrent matmuls with the VPU/EUP gating.
    for t in range(T):
        z = xw_all[t * B:(t + 1) * B, :] + jnp.dot(
            h.astype(cdt), wh, preferred_element_type=jnp.float32)
        f = jax.nn.sigmoid(z[:, 0 * H:1 * H])
        i = jax.nn.sigmoid(z[:, 1 * H:2 * H])
        o = jax.nn.sigmoid(z[:, 2 * H:3 * H])
        c_tilde = jnp.tanh(z[:, 3 * H:4 * H])
        c = f * c + i * c_tilde
        h = o * jnp.tanh(c)
        h_steps.append(h)
        c_steps.append(c)

    # Single lane-dense store per output (T*H = 256 lanes for T=8, H=32)
    # instead of T masked 32-lane partial stores.
    h_all_ref[...] = jnp.concatenate(h_steps, axis=-1)
    c_all_ref[...] = jnp.concatenate(c_steps, axis=-1)


def decoder_forward_seq(x_seq, hidden0, cell0, w_x, w_h, b,
                        *, use_bf16_weights=False):
    """Apply Decoder.forward sequentially over x_seq[(T,B,P)] in one kernel.

    Returns (h_seq, c_seq) each of shape (T, B, H) — exactly the states that
    T consecutive calls of the PyTorch forward would produce.
    """
    T, B, P = x_seq.shape
    H = hidden0.shape[1]

    x_flat = x_seq.reshape(T * B, P).astype(jnp.float32)
    b2 = b.reshape(1, 4 * H).astype(jnp.float32)
    if use_bf16_weights:
        # v6e / v7x: MXU is bf16-native; accumulation stays f32 in-kernel.
        w_x = w_x.astype(jnp.bfloat16)
        w_h = w_h.astype(jnp.bfloat16)

    vmem = pl.BlockSpec(memory_space=pltpu.MemorySpace.VMEM)
    h_all, c_all = pl.pallas_call(
        _decoder_seq_kernel,
        out_shape=(
            jax.ShapeDtypeStruct((B, T * H), jnp.float32),
            jax.ShapeDtypeStruct((B, T * H), jnp.float32),
        ),
        in_specs=[vmem, vmem, vmem, vmem, vmem, vmem],
        out_specs=(vmem, vmem),
    )(x_flat, w_x, w_h, b2, hidden0, cell0)

    # (B, T*H) lane-dense slab -> (T, B, H)
    h_seq = h_all.reshape(B, T, H).transpose(1, 0, 2)
    c_seq = c_all.reshape(B, T, H).transpose(1, 0, 2)
    return h_seq, c_seq


def decoder_forward(inp, hidden, cell, w_x, w_h, b, *, use_bf16_weights=False):
    """Single-step API matching the original Decoder.forward signature."""
    h_seq, c_seq = decoder_forward_seq(inp[None], hidden, cell, w_x, w_h, b,
                                       use_bf16_weights=use_bf16_weights)
    return h_seq[0], c_seq[0]


def init_decoder_params(key, stream_specific_param, hidden_size):
    """nn.Linear-style init: U(-1/sqrt(fan_in), 1/sqrt(fan_in)).

    Weights are pre-split into W_x (P,4H) and W_h (H,4H) so the kernel never
    needs a wrapper-side concat of (input, hidden).
    Column layout: [0:H]=fl, [H:2H]=il, [2H:3H]=ol, [3H:4H]=Cl.
    """
    P, H = stream_specific_param, hidden_size
    fan_in = P + H
    bound = 1.0 / math.sqrt(fan_in)
    kw, kb = jax.random.split(key)
    w = jax.random.uniform(kw, (fan_in, 4 * H), jnp.float32,
                           minval=-bound, maxval=bound)
    b = jax.random.uniform(kb, (4 * H,), jnp.float32,
                           minval=-bound, maxval=bound)
    w_x = w[:P, :]
    w_h = w[P:, :]
    return w_x, w_h, b


def _decoder_step_ref(inp, hidden, cell, w_x, w_h, b):
    """Pure-JAX reference for a single Decoder.forward step."""
    H = hidden.shape[1]
    z = inp @ w_x + hidden @ w_h + b
    f = jax.nn.sigmoid(z[:, 0 * H:1 * H])
    i = jax.nn.sigmoid(z[:, 1 * H:2 * H])
    o = jax.nn.sigmoid(z[:, 2 * H:3 * H])
    c_tilde = jnp.tanh(z[:, 3 * H:4 * H])
    c_new = f * cell + i * c_tilde
    h_new = o * jnp.tanh(c_new)
    return h_new, c_new


def decoder_forward_seq_ref(x_seq, hidden0, cell0, w_x, w_h, b):
    """Pure-JAX reference: T sequential calls of the single-step forward."""
    h, c = hidden0, cell0
    hs, cs = [], []
    for t in range(x_seq.shape[0]):
        h, c = _decoder_step_ref(x_seq[t], h, c, w_x, w_h, b)
        hs.append(h)
        cs.append(c)
    return jnp.stack(hs, axis=0), jnp.stack(cs, axis=0)


if __name__ == "__main__":
    # Decoder(stream='s1', input_size=5, cell_size=32, hidden_size=32,
    #         batchsize=2, timestep=8); stream 's1' -> input width = 5.
    batch = 2
    hidden_size = 32
    time_step = 8
    num_mog_params = 5

    key = jax.random.PRNGKey(0)
    k_x, k_h, k_c, k_p = jax.random.split(key, 4)

    x_seq = jax.random.normal(k_x, (time_step, batch, num_mog_params), jnp.float32)
    hidden0 = jax.random.normal(k_h, (batch, hidden_size), jnp.float32)
    cell0 = jax.random.normal(k_c, (batch, hidden_size), jnp.float32)
    w_x, w_h, b = init_decoder_params(k_p, num_mog_params, hidden_size)

    # --- f32 path (all generations) ---
    h_seq, c_seq = decoder_forward_seq(x_seq, hidden0, cell0, w_x, w_h, b)
    jax.block_until_ready((h_seq, c_seq))

    h_ref, c_ref = decoder_forward_seq_ref(x_seq, hidden0, cell0, w_x, w_h, b)
    assert jnp.allclose(h_seq, h_ref, rtol=1e-5, atol=1e-5)
    assert jnp.allclose(c_seq, c_ref, rtol=1e-5, atol=1e-5)

    # Single-step API parity with the original forward(input, H, C).
    h1, c1 = decoder_forward(x_seq[0], hidden0, cell0, w_x, w_h, b)
    h1_ref, c1_ref = _decoder_step_ref(x_seq[0], hidden0, cell0, w_x, w_h, b)
    assert jnp.allclose(h1, h1_ref, rtol=1e-5, atol=1e-5)
    assert jnp.allclose(c1, c1_ref, rtol=1e-5, atol=1e-5)

    # --- bf16-weight path (v6e / v7x MXU), f32 accumulate: looser tolerance ---
    h_bf, c_bf = decoder_forward_seq(x_seq, hidden0, cell0, w_x, w_h, b,
                                     use_bf16_weights=True)
    jax.block_until_ready((h_bf, c_bf))
    assert jnp.allclose(h_bf, h_ref, rtol=1e-1, atol=1e-1)
    assert jnp.allclose(c_bf, c_ref, rtol=1e-1, atol=1e-1)

    print("KERNEL_OK")
</pallas_src>

<mosaic_0001>
module attributes {stable_mosaic.version = 11 : i64} {
  func.func @_decoder_seq_kernel(%arg0: memref<16x5xf32, #tpu.memory_space<vmem>>, %arg1: memref<5x128xf32, #tpu.memory_space<vmem>>, %arg2: memref<32x128xf32, #tpu.memory_space<vmem>>, %arg3: memref<1x128xf32, #tpu.memory_space<vmem>>, %arg4: memref<2x32xf32, #tpu.memory_space<vmem>>, %arg5: memref<2x32xf32, #tpu.memory_space<vmem>>, %arg6: memref<2x256xf32, #tpu.memory_space<vmem>>, %arg7: memref<2x256xf32, #tpu.memory_space<vmem>>) attributes {dimension_semantics = [], scalar_prefetch = 0 : i64, scratch_operands = 0 : i64, tpu.core_type = #tpu.core_type<tc>} {
    %c0 = arith.constant 0 : index
    %c0_0 = arith.constant 0 : index
    %0 = vector.load %arg0[%c0, %c0_0] : memref<16x5xf32, #tpu.memory_space<vmem>>, vector<16x5xf32>
    %c0_1 = arith.constant 0 : index
    %c0_2 = arith.constant 0 : index
    %1 = vector.load %arg1[%c0_1, %c0_2] : memref<5x128xf32, #tpu.memory_space<vmem>>, vector<5x128xf32>
    %cst = arith.constant dense<0.000000e+00> : vector<16x128xf32>
    %2 = tpu.matmul %0, %1, %cst {dimension_numbers = #tpu.dot_dimension_numbers<[1], [0], [0], [1], [0, 0, 1, 1], [], []>} : vector<16x5xf32>, vector<5x128xf32>, vector<16x128xf32> -> vector<16x128xf32>
    %c0_3 = arith.constant 0 : index
    %c0_4 = arith.constant 0 : index
    %3 = vector.load %arg3[%c0_3, %c0_4] : memref<1x128xf32, #tpu.memory_space<vmem>>, vector<1x128xf32>
    %4 = vector.broadcast %3 : vector<1x128xf32> to vector<16x128xf32>
    %5 = arith.addf %2, %4 : vector<16x128xf32>
    %c0_5 = arith.constant 0 : index
    %c0_6 = arith.constant 0 : index
    %6 = vector.load %arg2[%c0_5, %c0_6] : memref<32x128xf32, #tpu.memory_space<vmem>>, vector<32x128xf32>
    %c0_7 = arith.constant 0 : index
    %c0_8 = arith.constant 0 : index
    %7 = vector.load %arg4[%c0_7, %c0_8] : memref<2x32xf32, #tpu.memory_space<vmem>>, vector<2x32xf32>
    %c0_9 = arith.constant 0 : index
    %c0_10 = arith.constant 0 : index
    %8 = vector.load %arg5[%c0_9, %c0_10] : memref<2x32xf32, #tpu.memory_space<vmem>>, vector<2x32xf32>
    %9 = vector.extract_strided_slice %5 {offsets = [0, 0], sizes = [2, 128], strides = [1, 1]} : vector<16x128xf32> to vector<2x128xf32>
    %cst_11 = arith.constant dense<0.000000e+00> : vector<2x128xf32>
    %10 = tpu.matmul %7, %6, %cst_11 {dimension_numbers = #tpu.dot_dimension_numbers<[1], [0], [0], [1], [0, 0, 1, 1], [], []>} : vector<2x32xf32>, vector<32x128xf32>, vector<2x128xf32> -> vector<2x128xf32>
    %11 = arith.addf %9, %10 : vector<2x128xf32>
    %12 = vector.extract_strided_slice %11 {offsets = [0, 0], sizes = [2, 32], strides = [1, 1]} : vector<2x128xf32> to vector<2x32xf32>
    %13 = arith.negf %12 : vector<2x32xf32>
    %14 = math.exp %13 : vector<2x32xf32>
    %cst_12 = arith.constant 1.000000e+00 : f32
    %15 = vector.broadcast %cst_12 : f32 to vector<2x32xf32>
    %16 = arith.addf %15, %14 : vector<2x32xf32>
    %17 = arith.divf %15, %16 : vector<2x32xf32>
    %18 = vector.extract_strided_slice %11 {offsets = [0, 32], sizes = [2, 32], strides = [1, 1]} : vector<2x128xf32> to vector<2x32xf32>
    %19 = arith.negf %18 : vector<2x32xf32>
    %20 = math.exp %19 : vector<2x32xf32>
    %cst_13 = arith.constant 1.000000e+00 : f32
    %21 = vector.broadcast %cst_13 : f32 to vector<2x32xf32>
    %22 = arith.addf %21, %20 : vector<2x32xf32>
    %23 = arith.divf %21, %22 : vector<2x32xf32>
    %24 = vector.extract_strided_slice %11 {offsets = [0, 64], sizes = [2, 32], strides = [1, 1]} : vector<2x128xf32> to vector<2x32xf32>
    %25 = arith.negf %24 : vector<2x32xf32>
    %26 = math.exp %25 : vector<2x32xf32>
    %cst_14 = arith.constant 1.000000e+00 : f32
    %27 = vector.broadcast %cst_14 : f32 to vector<2x32xf32>
    %28 = arith.addf %27, %26 : vector<2x32xf32>
    %29 = arith.divf %27, %28 : vector<2x32xf32>
    %30 = vector.extract_strided_slice %11 {offsets = [0, 96], sizes = [2, 32], strides = [1, 1]} : vector<2x128xf32> to vector<2x32xf32>
    %31 = math.tanh %30 : vector<2x32xf32>
    %32 = arith.mulf %17, %8 : vector<2x32xf32>
    %33 = arith.mulf %23, %31 : vector<2x32xf32>
    %34 = arith.addf %32, %33 : vector<2x32xf32>
    %35 = math.tanh %34 : vector<2x32xf32>
    %36 = arith.mulf %29, %35 : vector<2x32xf32>
    %37 = vector.extract_strided_slice %5 {offsets = [2, 0], sizes = [2, 128], strides = [1, 1]} : vector<16x128xf32> to vector<2x128xf32>
    %cst_15 = arith.constant dense<0.000000e+00> : vector<2x128xf32>
    %38 = tpu.matmul %36, %6, %cst_15 {dimension_numbers = #tpu.dot_dimension_numbers<[1], [0], [0], [1], [0, 0, 1, 1], [], []>} : vector<2x32xf32>, vector<32x128xf32>, vector<2x128xf32> -> vector<2x128xf32>
    %39 = arith.addf %37, %38 : vector<2x128xf32>
    %40 = vector.extract_strided_slice %39 {offsets = [0, 0], sizes = [2, 32], strides = [1, 1]} : vector<2x128xf32> to vector<2x32xf32>
    %41 = arith.negf %40 : vector<2x32xf32>
    %42 = math.exp %41 : vector<2x32xf32>
    %cst_16 = arith.constant 1.000000e+00 : f32
    %43 = vector.broadcast %cst_16 : f32 to vector<2x32xf32>
    %44 = arith.addf %43, %42 : vector<2x32xf32>
    %45 = arith.divf %43, %44 : vector<2x32xf32>
    %46 = vector.extract_strided_slice %39 {offsets = [0, 32], sizes = [2, 32], strides = [1, 1]} : vector<2x128xf32> to vector<2x32xf32>
    %47 = arith.negf %46 : vector<2x32xf32>
    %48 = math.exp %47 : vector<2x32xf32>
    %cst_17 = arith.constant 1.000000e+00 : f32
    %49 = vector.broadcast %cst_17 : f32 to vector<2x32xf32>
    %50 = arith.addf %49, %48 : vector<2x32xf32>
    %51 = arith.divf %49, %50 : vector<2x32xf32>
    %52 = vector.extract_strided_slice %39 {offsets = [0, 64], sizes = [2, 32], strides = [1, 1]} : vector<2x128xf32> to vector<2x32xf32>
    %53 = arith.negf %52 : vector<2x32xf32>
    %54 = math.exp %53 : vector<2x32xf32>
    %cst_18 = arith.constant 1.000000e+00 : f32
    %55 = vector.broadcast %cst_18 : f32 to vector<2x32xf32>
    %56 = arith.addf %55, %54 : vector<2x32xf32>
    %57 = arith.divf %55, %56 : vector<2x32xf32>
    %58 = vector.extract_strided_slice %39 {offsets = [0, 96], sizes = [2, 32], strides = [1, 1]} : vector<2x128xf32> to vector<2x32xf32>
    %59 = math.tanh %58 : vector<2x32xf32>
    %60 = arith.mulf %45, %34 : vector<2x32xf32>
    %61 = arith.mulf %51, %59 : vector<2x32xf32>
    %62 = arith.addf %60, %61 : vector<2x32xf32>
    %63 = math.tanh %62 : vector<2x32xf32>
    %64 = arith.mulf %57, %63 : vector<2x32xf32>
    %65 = vector.extract_strided_slice %5 {offsets = [4, 0], sizes = [2, 128], strides = [1, 1]} : vector<16x128xf32> to vector<2x128xf32>
    %cst_19 = arith.constant dense<0.000000e+00> : vector<2x128xf32>
    %66 = tpu.matmul %64, %6, %cst_19 {dimension_numbers = #tpu.dot_dimension_numbers<[1], [0], [0], [1], [0, 0, 1, 1], [], []>} : vector<2x32xf32>, vector<32x128xf32>, vector<2x128xf32> -> vector<2x128xf32>
    %67 = arith.addf %65, %66 : vector<2x128xf32>
    %68 = vector.extract_strided_slice %67 {offsets = [0, 0], sizes = [2, 32], strides = [1, 1]} : vector<2x128xf32> to vector<2x32xf32>
    %69 = arith.negf %68 : vector<2x32xf32>
    %70 = math.exp %69 : vector<2x32xf32>
    %cst_20 = arith.constant 1.000000e+00 : f32
    %71 = vector.broadcast %cst_20 : f32 to vector<2x32xf32>
    %72 = arith.addf %71, %70 : vector<2x32xf32>
    %73 = arith.divf %71, %72 : vector<2x32xf32>
    %74 = vector.extract_strided_slice %67 {offsets = [0, 32], sizes = [2, 32], strides = [1, 1]} : vector<2x128xf32> to vector<2x32xf32>
    %75 = arith.negf %74 : vector<2x32xf32>
    %76 = math.exp %75 : vector<2x32xf32>
    %cst_21 = arith.constant 1.000000e+00 : f32
    %77 = vector.broadcast %cst_21 : f32 to vector<2x32xf32>
    %78 = arith.addf %77, %76 : vector<2x32xf32>
    %79 = arith.divf %77, %78 : vector<2x32xf32>
    %80 = vector.extract_strided_slice %67 {offsets = [0, 64], sizes = [2, 32], strides = [1, 1]} : vector<2x128xf32> to vector<2x32xf32>
    %81 = arith.negf %80 : vector<2x32xf32>
    %82 = math.exp %81 : vector<2x32xf32>
    %cst_22 = arith.constant 1.000000e+00 : f32
    %83 = vector.broadcast %cst_22 : f32 to vector<2x32xf32>
    %84 = arith.addf %83, %82 : vector<2x32xf32>
    %85 = arith.divf %83, %84 : vector<2x32xf32>
    %86 = vector.extract_strided_slice %67 {offsets = [0, 96], sizes = [2, 32], strides = [1, 1]} : vector<2x128xf32> to vector<2x32xf32>
    %87 = math.tanh %86 : vector<2x32xf32>
    %88 = arith.mulf %73, %62 : vector<2x32xf32>
    %89 = arith.mulf %79, %87 : vector<2x32xf32>
    %90 = arith.addf %88, %89 : vector<2x32xf32>
    %91 = math.tanh %90 : vector<2x32xf32>
    %92 = arith.mulf %85, %91 : vector<2x32xf32>
    %93 = vector.extract_strided_slice %5 {offsets = [6, 0], sizes = [2, 128], strides = [1, 1]} : vector<16x128xf32> to vector<2x128xf32>
    %cst_23 = arith.constant dense<0.000000e+00> : vector<2x128xf32>
    %94 = tpu.matmul %92, %6, %cst_23 {dimension_numbers = #tpu.dot_dimension_numbers<[1], [0], [0], [1], [0, 0, 1, 1], [], []>} : vector<2x32xf32>, vector<32x128xf32>, vector<2x128xf32> -> vector<2x128xf32>
    %95 = arith.addf %93, %94 : vector<2x128xf32>
    %96 = vector.extract_strided_slice %95 {offsets = [0, 0], sizes = [2, 32], strides = [1, 1]} : vector<2x128xf32> to vector<2x32xf32>
    %97 = arith.negf %96 : vector<2x32xf32>
    %98 = math.exp %97 : vector<2x32xf32>
    %cst_24 = arith.constant 1.000000e+00 : f32
    %99 = vector.broadcast %cst_24 : f32 to vector<2x32xf32>
    %100 = arith.addf %99, %98 : vector<2x32xf32>
    %101 = arith.divf %99, %100 : vector<2x32xf32>
    %102 = vector.extract_strided_slice %95 {offsets = [0, 32], sizes = [2, 32], strides = [1, 1]} : vector<2x128xf32> to vector<2x32xf32>
    %103 = arith.negf %102 : vector<2x32xf32>
    %104 = math.exp %103 : vector<2x32xf32>
    %cst_25 = arith.constant 1.000000e+00 : f32
    %105 = vector.broadcast %cst_25 : f32 to vector<2x32xf32>
    %106 = arith.addf %105, %104 : vector<2x32xf32>
    %107 = arith.divf %105, %106 : vector<2x32xf32>
    %108 = vector.extract_strided_slice %95 {offsets = [0, 64], sizes = [2, 32], strides = [1, 1]} : vector<2x128xf32> to vector<2x32xf32>
    %109 = arith.negf %108 : vector<2x32xf32>
    %110 = math.exp %109 : vector<2x32xf32>
    %cst_26 = arith.constant 1.000000e+00 : f32
    %111 = vector.broadcast %cst_26 : f32 to vector<2x32xf32>
    %112 = arith.addf %111, %110 : vector<2x32xf32>
    %113 = arith.divf %111, %112 : vector<2x32xf32>
    %114 = vector.extract_strided_slice %95 {offsets = [0, 96], sizes = [2, 32], strides = [1, 1]} : vector<2x128xf32> to vector<2x32xf32>
    %115 = math.tanh %114 : vector<2x32xf32>
    %116 = arith.mulf %101, %90 : vector<2x32xf32>
    %117 = arith.mulf %107, %115 : vector<2x32xf32>
    %118 = arith.addf %116, %117 : vector<2x32xf32>
    %119 = math.tanh %118 : vector<2x32xf32>
    %120 = arith.mulf %113, %119 : vector<2x32xf32>
    %121 = vector.extract_strided_slice %5 {offsets = [8, 0], sizes = [2, 128], strides = [1, 1]} : vector<16x128xf32> to vector<2x128xf32>
    %cst_27 = arith.constant dense<0.000000e+00> : vector<2x128xf32>
    %122 = tpu.matmul %120, %6, %cst_27 {dimension_numbers = #tpu.dot_dimension_numbers<[1], [0], [0], [1], [0, 0, 1, 1], [], []>} : vector<2x32xf32>, vector<32x128xf32>, vector<2x128xf32> -> vector<2x128xf32>
    %123 = arith.addf %121, %122 : vector<2x128xf32>
    %124 = vector.extract_strided_slice %123 {offsets = [0, 0], sizes = [2, 32], strides = [1, 1]} : vector<2x128xf32> to vector<2x32xf32>
    %125 = arith.negf %124 : vector<2x32xf32>
    %126 = math.exp %125 : vector<2x32xf32>
    %cst_28 = arith.constant 1.000000e+00 : f32
    %127 = vector.broadcast %cst_28 : f32 to vector<2x32xf32>
    %128 = arith.addf %127, %126 : vector<2x32xf32>
    %129 = arith.divf %127, %128 : vector<2x32xf32>
    %130 = vector.extract_strided_slice %123 {offsets = [0, 32], sizes = [2, 32], strides = [1, 1]} : vector<2x128xf32> to vector<2x32xf32>
    %131 = arith.negf %130 : vector<2x32xf32>
    %132 = math.exp %131 : vector<2x32xf32>
    %cst_29 = arith.constant 1.000000e+00 : f32
    %133 = vector.broadcast %cst_29 : f32 to vector<2x32xf32>
    %134 = arith.addf %133, %132 : vector<2x32xf32>
    %135 = arith.divf %133, %134 : vector<2x32xf32>
    %136 = vector.extract_strided_slice %123 {offsets = [0, 64], sizes = [2, 32], strides = [1, 1]} : vector<2x128xf32> to vector<2x32xf32>
    %137 = arith.negf %136 : vector<2x32xf32>
    %138 = math.exp %137 : vector<2x32xf32>
    %cst_30 = arith.constant 1.000000e+00 : f32
    %139 = vector.broadcast %cst_30 : f32 to vector<2x32xf32>
    %140 = arith.addf %139, %138 : vector<2x32xf32>
    %141 = arith.divf %139, %140 : vector<2x32xf32>
    %142 = vector.extract_strided_slice %123 {offsets = [0, 96], sizes = [2, 32], strides = [1, 1]} : vector<2x128xf32> to vector<2x32xf32>
    %143 = math.tanh %142 : vector<2x32xf32>
    %144 = arith.mulf %129, %118 : vector<2x32xf32>
    %145 = arith.mulf %135, %143 : vector<2x32xf32>
    %146 = arith.addf %144, %145 : vector<2x32xf32>
    %147 = math.tanh %146 : vector<2x32xf32>
    %148 = arith.mulf %141, %147 : vector<2x32xf32>
    %149 = vector.extract_strided_slice %5 {offsets = [10, 0], sizes = [2, 128], strides = [1, 1]} : vector<16x128xf32> to vector<2x128xf32>
    %cst_31 = arith.constant dense<0.000000e+00> : vector<2x128xf32>
    %150 = tpu.matmul %148, %6, %cst_31 {dimension_numbers = #tpu.dot_dimension_numbers<[1], [0], [0], [1], [0, 0, 1, 1], [], []>} : vector<2x32xf32>, vector<32x128xf32>, vector<2x128xf32> -> vector<2x128xf32>
    %151 = arith.addf %149, %150 : vector<2x128xf32>
    %152 = vector.extract_strided_slice %151 {offsets = [0, 0], sizes = [2, 32], strides = [1, 1]} : vector<2x128xf32> to vector<2x32xf32>
    %153 = arith.negf %152 : vector<2x32xf32>
    %154 = math.exp %153 : vector<2x32xf32>
    %cst_32 = arith.constant 1.000000e+00 : f32
    %155 = vector.broadcast %cst_32 : f32 to vector<2x32xf32>
    %156 = arith.addf %155, %154 : vector<2x32xf32>
    %157 = arith.divf %155, %156 : vector<2x32xf32>
    %158 = vector.extract_strided_slice %151 {offsets = [0, 32], sizes = [2, 32], strides = [1, 1]} : vector<2x128xf32> to vector<2x32xf32>
    %159 = arith.negf %158 : vector<2x32xf32>
    %160 = math.exp %159 : vector<2x32xf32>
    %cst_33 = arith.constant 1.000000e+00 : f32
    %161 = vector.broadcast %cst_33 : f32 to vector<2x32xf32>
    %162 = arith.addf %161, %160 : vector<2x32xf32>
    %163 = arith.divf %161, %162 : vector<2x32xf32>
    %164 = vector.extract_strided_slice %151 {offsets = [0, 64], sizes = [2, 32], strides = [1, 1]} : vector<2x128xf32> to vector<2x32xf32>
    %165 = arith.negf %164 : vector<2x32xf32>
    %166 = math.exp %165 : vector<2x32xf32>
    %cst_34 = arith.constant 1.000000e+00 : f32
    %167 = vector.broadcast %cst_34 : f32 to vector<2x32xf32>
    %168 = arith.addf %167, %166 : vector<2x32xf32>
    %169 = arith.divf %167, %168 : vector<2x32xf32>
    %170 = vector.extract_strided_slice %151 {offsets = [0, 96], sizes = [2, 32], strides = [1, 1]} : vector<2x128xf32> to vector<2x32xf32>
    %171 = math.tanh %170 : vector<2x32xf32>
    %172 = arith.mulf %157, %146 : vector<2x32xf32>
    %173 = arith.mulf %163, %171 : vector<2x32xf32>
    %174 = arith.addf %172, %173 : vector<2x32xf32>
    %175 = math.tanh %174 : vector<2x32xf32>
    %176 = arith.mulf %169, %175 : vector<2x32xf32>
    %177 = vector.extract_strided_slice %5 {offsets = [12, 0], sizes = [2, 128], strides = [1, 1]} : vector<16x128xf32> to vector<2x128xf32>
    %cst_35 = arith.constant dense<0.000000e+00> : vector<2x128xf32>
    %178 = tpu.matmul %176, %6, %cst_35 {dimension_numbers = #tpu.dot_dimension_numbers<[1], [0], [0], [1], [0, 0, 1, 1], [], []>} : vector<2x32xf32>, vector<32x128xf32>, vector<2x128xf32> -> vector<2x128xf32>
    %179 = arith.addf %177, %178 : vector<2x128xf32>
    %180 = vector.extract_strided_slice %179 {offsets = [0, 0], sizes = [2, 32], strides = [1, 1]} : vector<2x128xf32> to vector<2x32xf32>
    %181 = arith.negf %180 : vector<2x32xf32>
    %182 = math.exp %181 : vector<2x32xf32>
    %cst_36 = arith.constant 1.000000e+00 : f32
    %183 = vector.broadcast %cst_36 : f32 to vector<2x32xf32>
    %184 = arith.addf %183, %182 : vector<2x32xf32>
    %185 = arith.divf %183, %184 : vector<2x32xf32>
    %186 = vector.extract_strided_slice %179 {offsets = [0, 32], sizes = [2, 32], strides = [1, 1]} : vector<2x128xf32> to vector<2x32xf32>
    %187 = arith.negf %186 : vector<2x32xf32>
    %188 = math.exp %187 : vector<2x32xf32>
    %cst_37 = arith.constant 1.000000e+00 : f32
    %189 = vector.broadcast %cst_37 : f32 to vector<2x32xf32>
    %190 = arith.addf %189, %188 : vector<2x32xf32>
    %191 = arith.divf %189, %190 : vector<2x32xf32>
    %192 = vector.extract_strided_slice %179 {offsets = [0, 64], sizes = [2, 32], strides = [1, 1]} : vector<2x128xf32> to vector<2x32xf32>
    %193 = arith.negf %192 : vector<2x32xf32>
    %194 = math.exp %193 : vector<2x32xf32>
    %cst_38 = arith.constant 1.000000e+00 : f32
    %195 = vector.broadcast %cst_38 : f32 to vector<2x32xf32>
    %196 = arith.addf %195, %194 : vector<2x32xf32>
    %197 = arith.divf %195, %196 : vector<2x32xf32>
    %198 = vector.extract_strided_slice %179 {offsets = [0, 96], sizes = [2, 32], strides = [1, 1]} : vector<2x128xf32> to vector<2x32xf32>
    %199 = math.tanh %198 : vector<2x32xf32>
    %200 = arith.mulf %185, %174 : vector<2x32xf32>
    %201 = arith.mulf %191, %199 : vector<2x32xf32>
    %202 = arith.addf %200, %201 : vector<2x32xf32>
    %203 = math.tanh %202 : vector<2x32xf32>
    %204 = arith.mulf %197, %203 : vector<2x32xf32>
    %205 = vector.extract_strided_slice %5 {offsets = [14, 0], sizes = [2, 128], strides = [1, 1]} : vector<16x128xf32> to vector<2x128xf32>
    %cst_39 = arith.constant dense<0.000000e+00> : vector<2x128xf32>
    %206 = tpu.matmul %204, %6, %cst_39 {dimension_numbers = #tpu.dot_dimension_numbers<[1], [0], [0], [1], [0, 0, 1, 1], [], []>} : vector<2x32xf32>, vector<32x128xf32>, vector<2x128xf32> -> vector<2x128xf32>
    %207 = arith.addf %205, %206 : vector<2x128xf32>
    %208 = vector.extract_strided_slice %207 {offsets = [0, 0], sizes = [2, 32], strides = [1, 1]} : vector<2x128xf32> to vector<2x32xf32>
    %209 = arith.negf %208 : vector<2x32xf32>
    %210 = math.exp %209 : vector<2x32xf32>
    %cst_40 = arith.constant 1.000000e+00 : f32
    %211 = vector.broadcast %cst_40 : f32 to vector<2x32xf32>
    %212 = arith.addf %211, %210 : vector<2x32xf32>
    %213 = arith.divf %211, %212 : vector<2x32xf32>
    %214 = vector.extract_strided_slice %207 {offsets = [0, 32], sizes = [2, 32], strides = [1, 1]} : vector<2x128xf32> to vector<2x32xf32>
    %215 = arith.negf %214 : vector<2x32xf32>
    %216 = math.exp %215 : vector<2x32xf32>
    %cst_41 = arith.constant 1.000000e+00 : f32
    %217 = vector.broadcast %cst_41 : f32 to vector<2x32xf32>
    %218 = arith.addf %217, %216 : vector<2x32xf32>
    %219 = arith.divf %217, %218 : vector<2x32xf32>
    %220 = vector.extract_strided_slice %207 {offsets = [0, 64], sizes = [2, 32], strides = [1, 1]} : vector<2x128xf32> to vector<2x32xf32>
    %221 = arith.negf %220 : vector<2x32xf32>
    %222 = math.exp %221 : vector<2x32xf32>
    %cst_42 = arith.constant 1.000000e+00 : f32
    %223 = vector.broadcast %cst_42 : f32 to vector<2x32xf32>
    %224 = arith.addf %223, %222 : vector<2x32xf32>
    %225 = arith.divf %223, %224 : vector<2x32xf32>
    %226 = vector.extract_strided_slice %207 {offsets = [0, 96], sizes = [2, 32], strides = [1, 1]} : vector<2x128xf32> to vector<2x32xf32>
    %227 = math.tanh %226 : vector<2x32xf32>
    %228 = arith.mulf %213, %202 : vector<2x32xf32>
    %229 = arith.mulf %219, %227 : vector<2x32xf32>
    %230 = arith.addf %228, %229 : vector<2x32xf32>
    %231 = math.tanh %230 : vector<2x32xf32>
    %232 = arith.mulf %225, %231 : vector<2x32xf32>
    %233 = tpu.concatenate %36, %64, %92, %120, %148, %176, %204, %232 in 1 : vector<2x32xf32>, vector<2x32xf32>, vector<2x32xf32>, vector<2x32xf32>, vector<2x32xf32>, vector<2x32xf32>, vector<2x32xf32>, vector<2x32xf32> -> vector<2x256xf32>
    %c0_43 = arith.constant 0 : index
    %c0_44 = arith.constant 0 : index
    %234 = vector.load %arg6[%c0_43, %c0_44] : memref<2x256xf32, #tpu.memory_space<vmem>>, vector<2x256xf32>
    tpu.vector_store %arg6[%c0_43, %c0_44], %233 {strides = array<i32>} : memref<2x256xf32, #tpu.memory_space<vmem>>, vector<2x256xf32>,
    %235 = tpu.concatenate %34, %62, %90, %118, %146, %174, %202, %230 in 1 : vector<2x32xf32>, vector<2x32xf32>, vector<2x32xf32>, vector<2x32xf32>, vector<2x32xf32>, vector<2x32xf32>, vector<2x32xf32>, vector<2x32xf32> -> vector<2x256xf32>
    %c0_45 = arith.constant 0 : index
    %c0_46 = arith.constant 0 : index
    %236 = vector.load %arg7[%c0_45, %c0_46] : memref<2x256xf32, #tpu.memory_space<vmem>>, vector<2x256xf32>
    tpu.vector_store %arg7[%c0_45, %c0_46], %235 {strides = array<i32>} : memref<2x256xf32, #tpu.memory_space<vmem>>, vector<2x256xf32>,
    return
  }
}

</mosaic_0001>

<llo_original>
// kernel: tpu_custom_call.1
$region0: #{tpu_custom_call.1}
  #allocation0 [shape = 'u32[]', space=smem, size = 0x4, offset = 0x4, fixed_abs, tag = 'smem constant byte address 0x4 - core index']
  #allocation1 [shape = 'u32[144,128]{1,0:T(1,128)}', space=vmem, size = 0x12000, scoped, tag = 'internal scratch']
  %s0 = inlined_call_operand.vmem [shape: f32[16,5], index: 0, kind: input, shape index: {}]
  %s1 = inlined_call_operand.vmem [shape: f32[5,128], index: 1, kind: input, shape index: {}]
  %s2 = inlined_call_operand.hbm [shape: f32[32,128], index: 2, kind: input, shape index: {}]
  %s3 = inlined_call_operand.vmem [shape: f32[1,128], index: 3, kind: input, shape index: {}]
  %s4 = inlined_call_operand.vmem [shape: f32[2,32], index: 4, kind: input, shape index: {}]
  %s5 = inlined_call_operand.vmem [shape: f32[2,32], index: 5, kind: input, shape index: {}]
  %s6 = inlined_call_operand.hbm [shape: f32[2,256], index: 6, kind: output, shape index: {0}]
  %s7 = inlined_call_operand.hbm [shape: f32[2,256], index: 7, kind: output, shape index: {1}]
  %8 = xla_tuple %s6, %s7
  %s9 = sld [smem:[#allocation0]]
  $region46: #{tpu_custom_call.1} parent=0
    _
  %s11 = ssub.s32 1, %s9
  %s12 = scalar_select 0, %s11, %s9
  $region1: #{tpu_custom_call.1} parent=0
    #allocation2 [shape = 'u8[16384]{0}', space=vmem, size = 0x4000, scoped, tag = 'input window, operand 2, single buffered']
    #allocation3 [shape = 's32[1]{0}', space=sflag, size = 0x4, scoped, tag = 'scoped memory for tpu_custom_call.1']
    #allocation4 [shape = 's32[1]{0}', space=sflag, size = 0x4, scoped, tag = 'scoped memory for tpu_custom_call.1']
    #allocation5 [shape = 'u8[2048]{0}', space=vmem, size = 0x800, scoped, tag = 'output window, operand 0, single buffered']
    #allocation6 [shape = 'u8[2048]{0}', space=vmem, size = 0x800, scoped, tag = 'output window, operand 1, single buffered']
    #allocation7 [shape = 's32[1]{0}', space=sflag, size = 0x4, scoped, tag = 'scoped memory for tpu_custom_call.1']
    %13 = vsyncpa [#allocation3], 0
    %14 = vsyncpa [#allocation4], 0
    %15 = vsyncpa [#allocation7], 0
    // Predicated region
    $region2: #{tpu_custom_call.1} parent=1 // pred_check
      _
    $region3: #{tpu_custom_call.1} parent=1 // pred_check_branch
      %17 = sbr.rel (0) target = $region5
    $region4: #{tpu_custom_call.1} parent=1 // pred_region
      _
    $region5: #{tpu_custom_call.1} parent=1 // pred_fallthru
      _
    // Predicated region
    $region6: #{tpu_custom_call.1} parent=1 // pred_check
      _
    $region7: #{tpu_custom_call.1} parent=1 // pred_check_branch
      %19 = sbr.rel (0) target = $region9
    $region8: #{tpu_custom_call.1} parent=1 // pred_region
      _
    $region9: #{tpu_custom_call.1} parent=1 // pred_fallthru
      _
    // Predicated region
    $region10: #{tpu_custom_call.1} parent=1 // pred_check
      _
    $region11: #{tpu_custom_call.1} parent=1 // pred_check_branch
      %21 = sbr.rel (0) target = $region13
    $region12: #{tpu_custom_call.1} parent=1 // pred_region
      %s23 = ssub.s32 512, 512
      %24 = vsyncadd [#allocation3], %s23
      %s25 = sshll.u32 [#allocation2], 4
      %s26 = int_to_ptr.vmem [resolvable:$true] %s25
      %31 = dma.hbm_to_vmem [thread:$0]  %s2, 512, %s26, [#allocation3], 128, 128, 8
    $region13: #{tpu_custom_call.1} parent=1 // pred_fallthru
      _
    // Predicated region
    $region14: #{tpu_custom_call.1} parent=1 // pred_check
      _
    $region15: #{tpu_custom_call.1} parent=1 // pred_check_branch
      %33 = sbr.rel (0) target = $region17
    $region16: #{tpu_custom_call.1} parent=1 // pred_region
      _
    $region17: #{tpu_custom_call.1} parent=1 // pred_fallthru
      _
    // Predicated region
    $region18: #{tpu_custom_call.1} parent=1 // pred_check
      _
    $region19: #{tpu_custom_call.1} parent=1 // pred_check_branch
      %35 = sbr.rel (0) target = $region21
    $region20: #{tpu_custom_call.1} parent=1 // pred_region
      _
    $region21: #{tpu_custom_call.1} parent=1 // pred_fallthru
      _
    // Predicated region
    $region22: #{tpu_custom_call.1} parent=1 // pred_check
      _
    $region23: #{tpu_custom_call.1} parent=1 // pred_check_branch
      %37 = sbr.rel (0) target = $region25
    $region24: #{tpu_custom_call.1} parent=1 // pred_region
      _
    $region25: #{tpu_custom_call.1} parent=1 // pred_fallthru
      _
    // Predicated region
    $region26: #{tpu_custom_call.1} parent=1 // pred_check
      _
    $region27: #{tpu_custom_call.1} parent=1 // pred_check_branch
      %39 = sbr.rel (0) target = $region29
    $region28: #{tpu_custom_call.1} parent=1 // pred_region
      %40 = dma.done [#allocation3], 512
    $region29: #{tpu_custom_call.1} parent=1 // pred_fallthru
      _
    %v41 = vld [vmem:[%s0] sm:$0xff]
    %v42 = vld [vmem:[%s0 + $0x8] sm:$0xff]
    %v43 = vld [vmem:[%s1] sm:$0x1f]
    %v44 = vld [vmem:[%s3] sm:$0x1]
    %v46 = vlaneseq
    %v47 = vshrl.u32 %v46, 7
    %v48 = vsub.s32 0, %v47
    %v49 = vrot.slane %v44, %v48
    %vm51 = vcmask 39936
    %v53 = vsel %vm51, %v41, 0
    %v56 = vsel %vm51, %v42, 0
    %vm58 = vcmask 1044480
    %v60 = vsel %vm58, %v43, 0
    %62 = vmatprep.subr.mxu0 0.0
    %63 = vmatpush1.msra.mxu0 %v60
    %64 = vmatprep.subr.mxu0 0.0
    %65 = vmatpush1.msra.mxu0 0.0
    %66 = vmatprep.subr.mxu0 0.0
    %67 = vmatpush1.msra.mxu0 0.0
    %68 = vmatprep.subr.mxu0 0.0
    %69 = vmatpush1.msra.mxu0 0.0
    %70 = vmatprep.subr.mxu0 0.0
    %71 = vmatpush1.msra.mxu0 0.0
    %72 = vmatprep.subr.mxu0 0.0
    %73 = vmatpush1.msra.mxu0 0.0
    %74 = vmatprep.subr.mxu0 0.0
    %75 = vmatpush1.msra.mxu0 0.0
    %76 = vmatprep.subr.mxu0 0.0
    %77 = vmatpush1.msra.mxu0 0.0
    %78 = vmatprep.subr.mxu0 0.0
    %79 = vmatpush1.msra.mxu0 0.0
    %80 = vmatprep.subr.mxu0 0.0
    %81 = vmatpush1.msra.mxu0 0.0
    %82 = vmatprep.subr.mxu0 0.0
    %83 = vmatpush1.msra.mxu0 0.0
    %84 = vmatprep.subr.mxu0 0.0
    %85 = vmatpush1.msra.mxu0 0.0
    %86 = vmatprep.subr.mxu0 0.0
    %87 = vmatpush1.msra.mxu0 0.0
    %88 = vmatprep.subr.mxu0 0.0
    %89 = vmatpush1.msra.mxu0 0.0
    %90 = vmatprep.subr.mxu0 0.0
    %91 = vmatpush1.msra.mxu0 0.0
    %92 = vmatprep.subr.mxu0 0.0
    %93 = vmatpush1.msra.mxu0 0.0
    %94 = vmatprep.subr.mxu0 0.0
    %95 = vmatpush1.msra.mxu0 0.0
    %96 = vmatprep.subr.mxu0 0.0
    %97 = vmatpush1.msra.mxu0 0.0
    %98 = vmatprep.subr.mxu0 0.0
    %99 = vmatpush1.msra.mxu0 0.0
    %100 = vmatprep.subr.mxu0 0.0
    %101 = vmatpush1.msra.mxu0 0.0
    %102 = vmatprep.subr.mxu0 0.0
    %103 = vmatpush1.msra.mxu0 0.0
    %104 = vmatprep.subr.mxu0 0.0
    %105 = vmatpush1.msra.mxu0 0.0
    %106 = vmatprep.subr.mxu0 0.0
    %107 = vmatpush1.msra.mxu0 0.0
    %108 = vmatprep.subr.mxu0 0.0
    %109 = vmatpush1.msra.mxu0 0.0
    %110 = vmatprep.subr.mxu0 0.0
    %111 = vmatpush1.msra.mxu0 0.0
    %112 = vmatprep.subr.mxu0 0.0
    %113 = vmatpush1.msra.mxu0 0.0
    %114 = vmatprep.subr.mxu0 0.0
    %115 = vmatpush1.msra.mxu0 0.0
    %116 = vmatprep.subr.mxu0 0.0
    %117 = vmatpush1.msra.mxu0 0.0
    %118 = vmatprep.subr.mxu0 0.0
    %119 = vmatpush1.msra.mxu0 0.0
    %120 = vmatprep.subr.mxu0 0.0
    %121 = vmatpush1.msra.mxu0 0.0
    %122 = vmatprep.subr.mxu0 0.0
    %123 = vmatpush1.msra.mxu0 0.0
    %124 = vmatprep.subr.mxu0 0.0
    %125 = vmatpush1.msra.mxu0 0.0
    %126 = vmatprep.mubr.f32.mxu0 0.0
    %127 = vmatmul.mubr.f32.gmra.mrb[0].mxu0 %v53
    %v128 = vpop.f32.mrb[0].mxu0
    %v129 = vadd.f32 %v49, %v128
    %v130 = vpop.f32.mrb[0].mxu0
    %131 = vmatprep.mubr.f32.mxu0 0.0
    %132 = vmatmul.mubr.f32.gmra.mrb[0].mxu0 %v56
    %v133 = vpop.f32.mrb[0].mxu0
    %v134 = vadd.f32 %v49, %v133
    %v135 = vpop.f32.mrb[0].mxu0
    %136 = vdwg.mxu0
    %v137 = vld [vmem:[#allocation2] sm:$0xff]
    %v138 = vld [vmem:[#allocation2 + $0x8] sm:$0xff]
    %v139 = vld [vmem:[#allocation2 + $0x10] sm:$0xff]
    %v140 = vld [vmem:[#allocation2 + $0x18] sm:$0xff]
    %v141 = vld [vmem:[%s4] sm:$0x3]
    %v142 = vld [vmem:[%s5] sm:$0x3]
    %vm143 = vcmask 261120
    %v145 = vsel %vm143, %v141, 0
    %147 = vmatprep.subr.mxu0 0.0
    %148 = vmatpush1.msra.mxu0 %v137
    %149 = vmatprep.subr.mxu0 0.0
    %150 = vmatpush1.msra.mxu0 %v138
    %151 = vmatprep.subr.mxu0 0.0
    %152 = vmatpush1.msra.mxu0 %v139
    %153 = vmatprep.subr.mxu0 0.0
    %154 = vmatpush1.msra.mxu0 %v140
    %155 = vmatprep.subr.mxu0 0.0
    %156 = vmatpush1.msra.mxu0 0.0
    %157 = vmatprep.subr.mxu0 0.0
    %158 = vmatpush1.msra.mxu0 0.0
    %159 = vmatprep.subr.mxu0 0.0
    %160 = vmatpush1.msra.mxu0 0.0
    %161 = vmatprep.subr.mxu0 0.0
    %162 = vmatpush1.msra.mxu0 0.0
    %163 = vmatprep.subr.mxu0 0.0
    %164 = vmatpush1.msra.mxu0 0.0
    %165 = vmatprep.subr.mxu0 0.0
    %166 = vmatpush1.msra.mxu0 0.0
    %167 = vmatprep.subr.mxu0 0.0
    %168 = vmatpush1.msra.mxu0 0.0
    %169 = vmatprep.subr.mxu0 0.0
    %170 = vmatpush1.msra.mxu0 0.0
    %171 = vmatprep.subr.mxu0 0.0
    %172 = vmatpush1.msra.mxu0 0.0
    %173 = vmatprep.subr.mxu0 0.0
    %174 = vmatpush1.msra.mxu0 0.0
    %175 = vmatprep.subr.mxu0 0.0
    %176 = vmatpush1.msra.mxu0 0.0
    %177 = vmatprep.subr.mxu0 0.0
    %178 = vmatpush1.msra.mxu0 0.0
    %179 = vmatprep.subr.mxu0 0.0
    %180 = vmatpush1.msra.mxu0 0.0
    %181 = vmatprep.subr.mxu0 0.0
    %182 = vmatpush1.msra.mxu0 0.0
    %183 = vmatprep.subr.mxu0 0.0
    %184 = vmatpush1.msra.mxu0 0.0
    %185 = vmatprep.subr.mxu0 0.0
    %186 = vmatpush1.msra.mxu0 0.0
    %187 = vmatprep.subr.mxu0 0.0
    %188 = vmatpush1.msra.mxu0 0.0
    %189 = vmatprep.subr.mxu0 0.0
    %190 = vmatpush1.msra.mxu0 0.0
    %191 = vmatprep.subr.mxu0 0.0
    %192 = vmatpush1.msra.mxu0 0.0
    %193 = vmatprep.subr.mxu0 0.0
    %194 = vmatpush1.msra.mxu0 0.0
    %195 = vmatprep.subr.mxu0 0.0
    %196 = vmatpush1.msra.mxu0 0.0
    %197 = vmatprep.subr.mxu0 0.0
    %198 = vmatpush1.msra.mxu0 0.0
    %199 = vmatprep.subr.mxu0 0.0
    %200 = vmatpush1.msra.mxu0 0.0
    %201 = vmatprep.subr.mxu0 0.0
    %202 = vmatpush1.msra.mxu0 0.0
    %203 = vmatprep.subr.mxu0 0.0
    %204 = vmatpush1.msra.mxu0 0.0
    %205 = vmatprep.subr.mxu0 0.0
    %206 = vmatpush1.msra.mxu0 0.0
    %207 = vmatprep.subr.mxu0 0.0
    %208 = vmatpush1.msra.mxu0 0.0
    %209 = vmatprep.subr.mxu0 0.0
    %210 = vmatpush1.msra.mxu0 0.0
    %211 = vmatprep.mubr.f32.mxu0 0.0
    %212 = vmatmul.mubr.f32.gmra.mrb[0].mxu0 %v145
    %v213 = vpop.f32.mrb[0].mxu0
    %v214 = vadd.f32 0.0, %v213
    %v215 = vpop.f32.mrb[0].mxu0
    %216 = vdwg.mxu0
    %v217 = vadd.f32 %v129, %v214
    %v218 = vxor.u32 %v217, 2147483648
    %v219 = vmul.f32 %v218, 1.442695
    %v220 = vpow.pop %v219
    %v221 = vadd.f32 %v220, 1.0
    %v222 = vrcp.pop %v221
    %v223 = vmul.f32 1.0, %v222
    %v224 = vtanh.pop %v217
    %v225 = vmul.f32 %v223, %v142
    %227 = vrot.lane.b32.xlu0 %v224, 64
    %v228 = vpop.permute.xlu0 %227
    %v230 = vmul.f32 %v223, %v228
    %232 = vrot.lane.b32.xlu0 %v230, 96
    %v233 = vpop.permute.xlu0 %232
    %v235 = vadd.f32 %v225, %v233
    %v236 = vtanh.pop %v235
    %238 = vrot.lane.b32.xlu0 %v236, 64
    %v239 = vpop.permute.xlu0 %238
    %v241 = vmul.f32 %v223, %v239
    %243 = vrot.lane.b32.xlu0 %v241, 64
    %v244 = vpop.permute.xlu0 %243
    %v245 = vsel %vm143, %v244, 0
    %247 = vmatprep.subr.mxu0 0.0
    %248 = vmatpush1.msra.mxu0 %v137
    %249 = vmatprep.subr.mxu0 0.0
    %250 = vmatpush1.msra.mxu0 %v138
    %251 = vmatprep.subr.mxu0 0.0
    %252 = vmatpush1.msra.mxu0 %v139
    %253 = vmatprep.subr.mxu0 0.0
    %254 = vmatpush1.msra.mxu0 %v140
    %255 = vmatprep.subr.mxu0 0.0
    %256 = vmatpush1.msra.mxu0 0.0
    %257 = vmatprep.subr.mxu0 0.0
    %258 = vmatpush1.msra.mxu0 0.0
    %259 = vmatprep.subr.mxu0 0.0
    %260 = vmatpush1.msra.mxu0 0.0
    %261 = vmatprep.subr.mxu0 0.0
    %262 = vmatpush1.msra.mxu0 0.0
    %263 = vmatprep.subr.mxu0 0.0
    %264 = vmatpush1.msra.mxu0 0.0
    %265 = vmatprep.subr.mxu0 0.0
    %266 = vmatpush1.msra.mxu0 0.0
    %267 = vmatprep.subr.mxu0 0.0
    %268 = vmatpush1.msra.mxu0 0.0
    %269 = vmatprep.subr.mxu0 0.0
    %270 = vmatpush1.msra.mxu0 0.0
    %271 = vmatprep.subr.mxu0 0.0
    %272 = vmatpush1.msra.mxu0 0.0
    %273 = vmatprep.subr.mxu0 0.0
    %274 = vmatpush1.msra.mxu0 0.0
    %275 = vmatprep.subr.mxu0 0.0
    %276 = vmatpush1.msra.mxu0 0.0
    %277 = vmatprep.subr.mxu0 0.0
    %278 = vmatpush1.msra.mxu0 0.0
    %279 = vmatprep.subr.mxu0 0.0
    %280 = vmatpush1.msra.mxu0 0.0
    %281 = vmatprep.subr.mxu0 0.0
    %282 = vmatpush1.msra.mxu0 0.0
    %283 = vmatprep.subr.mxu0 0.0
    %284 = vmatpush1.msra.mxu0 0.0
    %285 = vmatprep.subr.mxu0 0.0
    %286 = vmatpush1.msra.mxu0 0.0
    %287 = vmatprep.subr.mxu0 0.0
    %288 = vmatpush1.msra.mxu0 0.0
    %289 = vmatprep.subr.mxu0 0.0
    %290 = vmatpush1.msra.mxu0 0.0
    %291 = vmatprep.subr.mxu0 0.0
    %292 = vmatpush1.msra.mxu0 0.0
    %293 = vmatprep.subr.mxu0 0.0
    %294 = vmatpush1.msra.mxu0 0.0
    %295 = vmatprep.subr.mxu0 0.0
    %296 = vmatpush1.msra.mxu0 0.0
    %297 = vmatprep.subr.mxu0 0.0
    %298 = vmatpush1.msra.mxu0 0.0
    %299 = vmatprep.subr.mxu0 0.0
    %300 = vmatpush1.msra.mxu0 0.0
    %301 = vmatprep.subr.mxu0 0.0
    %302 = vmatpush1.msra.mxu0 0.0
    %303 = vmatprep.subr.mxu0 0.0
    %304 = vmatpush1.msra.mxu0 0.0
    %305 = vmatprep.subr.mxu0 0.0
    %306 = vmatpush1.msra.mxu0 0.0
    %307 = vmatprep.subr.mxu0 0.0
    %308 = vmatpush1.msra.mxu0 0.0
    %309 = vmatprep.subr.mxu0 0.0
    %310 = vmatpush1.msra.mxu0 0.0
    %311 = vmatprep.mubr.f32.mxu0 0.0
    %312 = vmatmul.mubr.f32.gmra.mrb[0].mxu0 %v245
    %v313 = vpop.f32.mrb[0].mxu0
    %v314 = vadd.f32 0.0, %v313
    %v315 = vpop.f32.mrb[0].mxu0
    %316 = vdwg.mxu0
    %v318 = vrot.slane %v314, 6
    %v320 = vadd.f32 %v129, %v318
    %v321 = vxor.u32 %v320, 2147483648
    %v322 = vmul.f32 %v321, 1.442695
    %v323 = vpow.pop %v322
    %v324 = vadd.f32 %v323, 1.0
    %v325 = vrcp.pop %v324
    %v326 = vmul.f32 1.0, %v325
    %v327 = vtanh.pop %v320
    %v329 = vrot.slane %v235, 6
    %v331 = vmul.f32 %v326, %v329
    %333 = vrot.lane.b32.xlu0 %v327, 64
    %v334 = vpop.permute.xlu0 %333
    %v336 = vmul.f32 %v326, %v334
    %338 = vrot.lane.b32.xlu0 %v336, 96
    %v339 = vpop.permute.xlu0 %338
    %v341 = vadd.f32 %v331, %v339
    %v342 = vtanh.pop %v341
    %344 = vrot.lane.b32.xlu0 %v342, 64
    %v345 = vpop.permute.xlu0 %344
    %v347 = vmul.f32 %v326, %v345
    %v349 = vrot.slane %v347, 2
    %350 = vrot.lane.b32.xlu0 %v349, 64
    %v351 = vpop.permute.xlu0 %350
    %v352 = vsel %vm143, %v351, 0
    %354 = vmatprep.subr.mxu0 0.0
    %355 = vmatpush1.msra.mxu0 %v137
    %356 = vmatprep.subr.mxu0 0.0
    %357 = vmatpush1.msra.mxu0 %v138
    %358 = vmatprep.subr.mxu0 0.0
    %359 = vmatpush1.msra.mxu0 %v139
    %360 = vmatprep.subr.mxu0 0.0
    %361 = vmatpush1.msra.mxu0 %v140
    %362 = vmatprep.subr.mxu0 0.0
    %363 = vmatpush1.msra.mxu0 0.0
    %364 = vmatprep.subr.mxu0 0.0
    %365 = vmatpush1.msra.mxu0 0.0
    %366 = vmatprep.subr.mxu0 0.0
    %367 = vmatpush1.msra.mxu0 0.0
    %368 = vmatprep.subr.mxu0 0.0
    %369 = vmatpush1.msra.mxu0 0.0
    %370 = vmatprep.subr.mxu0 0.0
    %371 = vmatpush1.msra.mxu0 0.0
    %372 = vmatprep.subr.mxu0 0.0
    %373 = vmatpush1.msra.mxu0 0.0
    %374 = vmatprep.subr.mxu0 0.0
    %375 = vmatpush1.msra.mxu0 0.0
    %376 = vmatprep.subr.mxu0 0.0
    %377 = vmatpush1.msra.mxu0 0.0
    %378 = vmatprep.subr.mxu0 0.0
    %379 = vmatpush1.msra.mxu0 0.0
    %380 = vmatprep.subr.mxu0 0.0
    %381 = vmatpush1.msra.mxu0 0.0
    %382 = vmatprep.subr.mxu0 0.0
    %383 = vmatpush1.msra.mxu0 0.0
    %384 = vmatprep.subr.mxu0 0.0
    %385 = vmatpush1.msra.mxu0 0.0
    %386 = vmatprep.subr.mxu0 0.0
    %387 = vmatpush1.msra.mxu0 0.0
    %388 = vmatprep.subr.mxu0 0.0
    %389 = vmatpush1.msra.mxu0 0.0
    %390 = vmatprep.subr.mxu0 0.0
    %391 = vmatpush1.msra.mxu0 0.0
    %392 = vmatprep.subr.mxu0 0.0
    %393 = vmatpush1.msra.mxu0 0.0
    %394 = vmatprep.subr.mxu0 0.0
    %395 = vmatpush1.msra.mxu0 0.0
    %396 = vmatprep.subr.mxu0 0.0
    %397 = vmatpush1.msra.mxu0 0.0
    %398 = vmatprep.subr.mxu0 0.0
    %399 = vmatpush1.msra.mxu0 0.0
    %400 = vmatprep.subr.mxu0 0.0
    %401 = vmatpush1.msra.mxu0 0.0
    %402 = vmatprep.subr.mxu0 0.0
    %403 = vmatpush1.msra.mxu0 0.0
    %404 = vmatprep.subr.mxu0 0.0
    %405 = vmatpush1.msra.mxu0 0.0
    %406 = vmatprep.subr.mxu0 0.0
    %407 = vmatpush1.msra.mxu0 0.0
    %408 = vmatprep.subr.mxu0 0.0
    %409 = vmatpush1.msra.mxu0 0.0
    %410 = vmatprep.subr.mxu0 0.0
    %411 = vmatpush1.msra.mxu0 0.0
    %412 = vmatprep.subr.mxu0 0.0
    %413 = vmatpush1.msra.mxu0 0.0
    %414 = vmatprep.subr.mxu0 0.0
    %415 = vmatpush1.msra.mxu0 0.0
    %416 = vmatprep.subr.mxu0 0.0
    %417 = vmatpush1.msra.mxu0 0.0
    %418 = vmatprep.mubr.f32.mxu0 0.0
    %419 = vmatmul.mubr.f32.gmra.mrb[0].mxu0 %v352
    %v420 = vpop.f32.mrb[0].mxu0
    %v421 = vadd.f32 0.0, %v420
    %v422 = vpop.f32.mrb[0].mxu0
    %423 = vdwg.mxu0
    %v425 = vrot.slane %v421, 4
    %v427 = vadd.f32 %v129, %v425
    %v428 = vxor.u32 %v427, 2147483648
    %v429 = vmul.f32 %v428, 1.442695
    %v430 = vpow.pop %v429
    %v431 = vadd.f32 %v430, 1.0
    %v432 = vrcp.pop %v431
    %v433 = vmul.f32 1.0, %v432
    %v434 = vtanh.pop %v427
    %v436 = vrot.slane %v341, 6
    %v438 = vmul.f32 %v433, %v436
    %440 = vrot.lane.b32.xlu0 %v434, 64
    %v441 = vpop.permute.xlu0 %440
    %v443 = vmul.f32 %v433, %v441
    %445 = vrot.lane.b32.xlu0 %v443, 96
    %v446 = vpop.permute.xlu0 %445
    %v448 = vadd.f32 %v438, %v446
    %v449 = vtanh.pop %v448
    %451 = vrot.lane.b32.xlu0 %v449, 64
    %v452 = vpop.permute.xlu0 %451
    %v454 = vmul.f32 %v433, %v452
    %v456 = vrot.slane %v454, 4
    %457 = vrot.lane.b32.xlu0 %v456, 64
    %v458 = vpop.permute.xlu0 %457
    %v459 = vsel %vm143, %v458, 0
    %461 = vmatprep.subr.mxu0 0.0
    %462 = vmatpush1.msra.mxu0 %v137
    %463 = vmatprep.subr.mxu0 0.0
    %464 = vmatpush1.msra.mxu0 %v138
    %465 = vmatprep.subr.mxu0 0.0
    %466 = vmatpush1.msra.mxu0 %v139
    %467 = vmatprep.subr.mxu0 0.0
    %468 = vmatpush1.msra.mxu0 %v140
    %469 = vmatprep.subr.mxu0 0.0
    %470 = vmatpush1.msra.mxu0 0.0
    %471 = vmatprep.subr.mxu0 0.0
    %472 = vmatpush1.msra.mxu0 0.0
    %473 = vmatprep.subr.mxu0 0.0
    %474 = vmatpush1.msra.mxu0 0.0
    %475 = vmatprep.subr.mxu0 0.0
    %476 = vmatpush1.msra.mxu0 0.0
    %477 = vmatprep.subr.mxu0 0.0
    %478 = vmatpush1.msra.mxu0 0.0
    %479 = vmatprep.subr.mxu0 0.0
    %480 = vmatpush1.msra.mxu0 0.0
    %481 = vmatprep.subr.mxu0 0.0
    %482 = vmatpush1.msra.mxu0 0.0
    %483 = vmatprep.subr.mxu0 0.0
    %484 = vmatpush1.msra.mxu0 0.0
    %485 = vmatprep.subr.mxu0 0.0
    %486 = vmatpush1.msra.mxu0 0.0
    %487 = vmatprep.subr.mxu0 0.0
    %488 = vmatpush1.msra.mxu0 0.0
    %489 = vmatprep.subr.mxu0 0.0
    %490 = vmatpush1.msra.mxu0 0.0
    %491 = vmatprep.subr.mxu0 0.0
    %492 = vmatpush1.msra.mxu0 0.0
    %493 = vmatprep.subr.mxu0 0.0
    %494 = vmatpush1.msra.mxu0 0.0
    %495 = vmatprep.subr.mxu0 0.0
    %496 = vmatpush1.msra.mxu0 0.0
    %497 = vmatprep.subr.mxu0 0.0
    %498 = vmatpush1.msra.mxu0 0.0
    %499 = vmatprep.subr.mxu0 0.0
    %500 = vmatpush1.msra.mxu0 0.0
    %501 = vmatprep.subr.mxu0 0.0
    %502 = vmatpush1.msra.mxu0 0.0
    %503 = vmatprep.subr.mxu0 0.0
    %504 = vmatpush1.msra.mxu0 0.0
    %505 = vmatprep.subr.mxu0 0.0
    %506 = vmatpush1.msra.mxu0 0.0
    %507 = vmatprep.subr.mxu0 0.0
    %508 = vmatpush1.msra.mxu0 0.0
    %509 = vmatprep.subr.mxu0 0.0
    %510 = vmatpush1.msra.mxu0 0.0
    %511 = vmatprep.subr.mxu0 0.0
    %512 = vmatpush1.msra.mxu0 0.0
    %513 = vmatprep.subr.mxu0 0.0
    %514 = vmatpush1.msra.mxu0 0.0
    %515 = vmatprep.subr.mxu0 0.0
    %516 = vmatpush1.msra.mxu0 0.0
    %517 = vmatprep.subr.mxu0 0.0
    %518 = vmatpush1.msra.mxu0 0.0
    %519 = vmatprep.subr.mxu0 0.0
    %520 = vmatpush1.msra.mxu0 0.0
    %521 = vmatprep.subr.mxu0 0.0
    %522 = vmatpush1.msra.mxu0 0.0
    %523 = vmatprep.subr.mxu0 0.0
    %524 = vmatpush1.msra.mxu0 0.0
    %525 = vmatprep.mubr.f32.mxu0 0.0
    %526 = vmatmul.mubr.f32.gmra.mrb[0].mxu0 %v459
    %v527 = vpop.f32.mrb[0].mxu0
    %v528 = vadd.f32 0.0, %v527
    %v529 = vpop.f32.mrb[0].mxu0
    %530 = vdwg.mxu0
    %v532 = vrot.slane %v528, 2
    %v534 = vadd.f32 %v129, %v532
    %v535 = vxor.u32 %v534, 2147483648
    %v536 = vmul.f32 %v535, 1.442695
    %v537 = vpow.pop %v536
    %v538 = vadd.f32 %v537, 1.0
    %v539 = vrcp.pop %v538
    %v540 = vmul.f32 1.0, %v539
    %v541 = vtanh.pop %v534
    %v543 = vrot.slane %v448, 6
    %v545 = vmul.f32 %v540, %v543
    %547 = vrot.lane.b32.xlu0 %v541, 64
    %v548 = vpop.permute.xlu0 %547
    %v550 = vmul.f32 %v540, %v548
    %552 = vrot.lane.b32.xlu0 %v550, 96
    %v553 = vpop.permute.xlu0 %552
    %v555 = vadd.f32 %v545, %v553
    %v556 = vtanh.pop %v555
    %558 = vrot.lane.b32.xlu0 %v556, 64
    %v559 = vpop.permute.xlu0 %558
    %v561 = vmul.f32 %v540, %v559
    %v563 = vrot.slane %v561, 6
    %564 = vrot.lane.b32.xlu0 %v563, 64
    %v565 = vpop.permute.xlu0 %564
    %v566 = vsel %vm143, %v565, 0
    %568 = vmatprep.subr.mxu0 0.0
    %569 = vmatpush1.msra.mxu0 %v137
    %570 = vmatprep.subr.mxu0 0.0
    %571 = vmatpush1.msra.mxu0 %v138
    %572 = vmatprep.subr.mxu0 0.0
    %573 = vmatpush1.msra.mxu0 %v139
    %574 = vmatprep.subr.mxu0 0.0
    %575 = vmatpush1.msra.mxu0 %v140
    %576 = vmatprep.subr.mxu0 0.0
    %577 = vmatpush1.msra.mxu0 0.0
    %578 = vmatprep.subr.mxu0 0.0
    %579 = vmatpush1.msra.mxu0 0.0
    %580 = vmatprep.subr.mxu0 0.0
    %581 = vmatpush1.msra.mxu0 0.0
    %582 = vmatprep.subr.mxu0 0.0
    %583 = vmatpush1.msra.mxu0 0.0
    %584 = vmatprep.subr.mxu0 0.0
    %585 = vmatpush1.msra.mxu0 0.0
    %586 = vmatprep.subr.mxu0 0.0
    %587 = vmatpush1.msra.mxu0 0.0
    %588 = vmatprep.subr.mxu0 0.0
    %589 = vmatpush1.msra.mxu0 0.0
    %590 = vmatprep.subr.mxu0 0.0
    %591 = vmatpush1.msra.mxu0 0.0
    %592 = vmatprep.subr.mxu0 0.0
    %593 = vmatpush1.msra.mxu0 0.0
    %594 = vmatprep.subr.mxu0 0.0
    %595 = vmatpush1.msra.mxu0 0.0
    %596 = vmatprep.subr.mxu0 0.0
    %597 = vmatpush1.msra.mxu0 0.0
    %598 = vmatprep.subr.mxu0 0.0
    %599 = vmatpush1.msra.mxu0 0.0
    %600 = vmatprep.subr.mxu0 0.0
    %601 = vmatpush1.msra.mxu0 0.0
    %602 = vmatprep.subr.mxu0 0.0
    %603 = vmatpush1.msra.mxu0 0.0
    %604 = vmatprep.subr.mxu0 0.0
    %605 = vmatpush1.msra.mxu0 0.0
    %606 = vmatprep.subr.mxu0 0.0
    %607 = vmatpush1.msra.mxu0 0.0
    %608 = vmatprep.subr.mxu0 0.0
    %609 = vmatpush1.msra.mxu0 0.0
    %610 = vmatprep.subr.mxu0 0.0
    %611 = vmatpush1.msra.mxu0 0.0
    %612 = vmatprep.subr.mxu0 0.0
    %613 = vmatpush1.msra.mxu0 0.0
    %614 = vmatprep.subr.mxu0 0.0
    %615 = vmatpush1.msra.mxu0 0.0
    %616 = vmatprep.subr.mxu0 0.0
    %617 = vmatpush1.msra.mxu0 0.0
    %618 = vmatprep.subr.mxu0 0.0
    %619 = vmatpush1.msra.mxu0 0.0
    %620 = vmatprep.subr.mxu0 0.0
    %621 = vmatpush1.msra.mxu0 0.0
    %622 = vmatprep.subr.mxu0 0.0
    %623 = vmatpush1.msra.mxu0 0.0
    %624 = vmatprep.subr.mxu0 0.0
    %625 = vmatpush1.msra.mxu0 0.0
    %626 = vmatprep.subr.mxu0 0.0
    %627 = vmatpush1.msra.mxu0 0.0
    %628 = vmatprep.subr.mxu0 0.0
    %629 = vmatpush1.msra.mxu0 0.0
    %630 = vmatprep.subr.mxu0 0.0
    %631 = vmatpush1.msra.mxu0 0.0
    %632 = vmatprep.mubr.f32.mxu0 0.0
    %633 = vmatmul.mubr.f32.gmra.mrb[0].mxu0 %v566
    %v634 = vpop.f32.mrb[0].mxu0
    %v635 = vadd.f32 0.0, %v634
    %v636 = vpop.f32.mrb[0].mxu0
    %637 = vdwg.mxu0
    %v638 = vadd.f32 %v134, %v635
    %v639 = vxor.u32 %v638, 2147483648
    %v640 = vmul.f32 %v639, 1.442695
    %v641 = vpow.pop %v640
    %v642 = vadd.f32 %v641, 1.0
    %v643 = vrcp.pop %v642
    %v644 = vmul.f32 1.0, %v643
    %v645 = vtanh.pop %v638
    %v647 = vrot.slane %v555, 6
    %v649 = vmul.f32 %v644, %v647
    %651 = vrot.lane.b32.xlu0 %v645, 64
    %v652 = vpop.permute.xlu0 %651
    %v654 = vmul.f32 %v644, %v652
    %656 = vrot.lane.b32.xlu0 %v654, 96
    %v657 = vpop.permute.xlu0 %656
    %v659 = vadd.f32 %v649, %v657
    %v660 = vtanh.pop %v659
    %662 = vrot.lane.b32.xlu0 %v660, 64
    %v663 = vpop.permute.xlu0 %662
    %v665 = vmul.f32 %v644, %v663
    %667 = vrot.lane.b32.xlu0 %v665, 64
    %v668 = vpop.permute.xlu0 %667
    %v669 = vsel %vm143, %v668, 0
    %671 = vmatprep.subr.mxu0 0.0
    %672 = vmatpush1.msra.mxu0 %v137
    %673 = vmatprep.subr.mxu0 0.0
    %674 = vmatpush1.msra.mxu0 %v138
    %675 = vmatprep.subr.mxu0 0.0
    %676 = vmatpush1.msra.mxu0 %v139
    %677 = vmatprep.subr.mxu0 0.0
    %678 = vmatpush1.msra.mxu0 %v140
    %679 = vmatprep.subr.mxu0 0.0
    %680 = vmatpush1.msra.mxu0 0.0
    %681 = vmatprep.subr.mxu0 0.0
    %682 = vmatpush1.msra.mxu0 0.0
    %683 = vmatprep.subr.mxu0 0.0
    %684 = vmatpush1.msra.mxu0 0.0
    %685 = vmatprep.subr.mxu0 0.0
    %686 = vmatpush1.msra.mxu0 0.0
    %687 = vmatprep.subr.mxu0 0.0
    %688 = vmatpush1.msra.mxu0 0.0
    %689 = vmatprep.subr.mxu0 0.0
    %690 = vmatpush1.msra.mxu0 0.0
    %691 = vmatprep.subr.mxu0 0.0
    %692 = vmatpush1.msra.mxu0 0.0
    %693 = vmatprep.subr.mxu0 0.0
    %694 = vmatpush1.msra.mxu0 0.0
    %695 = vmatprep.subr.mxu0 0.0
    %696 = vmatpush1.msra.mxu0 0.0
    %697 = vmatprep.subr.mxu0 0.0
    %698 = vmatpush1.msra.mxu0 0.0
    %699 = vmatprep.subr.mxu0 0.0
    %700 = vmatpush1.msra.mxu0 0.0
    %701 = vmatprep.subr.mxu0 0.0
    %702 = vmatpush1.msra.mxu0 0.0
    %703 = vmatprep.subr.mxu0 0.0
    %704 = vmatpush1.msra.mxu0 0.0
    %705 = vmatprep.subr.mxu0 0.0
    %706 = vmatpush1.msra.mxu0 0.0
    %707 = vmatprep.subr.mxu0 0.0
    %708 = vmatpush1.msra.mxu0 0.0
    %709 = vmatprep.subr.mxu0 0.0
    %710 = vmatpush1.msra.mxu0 0.0
    %711 = vmatprep.subr.mxu0 0.0
    %712 = vmatpush1.msra.mxu0 0.0
    %713 = vmatprep.subr.mxu0 0.0
    %714 = vmatpush1.msra.mxu0 0.0
    %715 = vmatprep.subr.mxu0 0.0
    %716 = vmatpush1.msra.mxu0 0.0
    %717 = vmatprep.subr.mxu0 0.0
    %718 = vmatpush1.msra.mxu0 0.0
    %719 = vmatprep.subr.mxu0 0.0
    %720 = vmatpush1.msra.mxu0 0.0
    %721 = vmatprep.subr.mxu0 0.0
    %722 = vmatpush1.msra.mxu0 0.0
    %723 = vmatprep.subr.mxu0 0.0
    %724 = vmatpush1.msra.mxu0 0.0
    %725 = vmatprep.subr.mxu0 0.0
    %726 = vmatpush1.msra.mxu0 0.0
    %727 = vmatprep.subr.mxu0 0.0
    %728 = vmatpush1.msra.mxu0 0.0
    %729 = vmatprep.subr.mxu0 0.0
    %730 = vmatpush1.msra.mxu0 0.0
    %731 = vmatprep.subr.mxu0 0.0
    %732 = vmatpush1.msra.mxu0 0.0
    %733 = vmatprep.subr.mxu0 0.0
    %734 = vmatpush1.msra.mxu0 0.0
    %735 = vmatprep.mubr.f32.mxu0 0.0
    %736 = vmatmul.mubr.f32.gmra.mrb[0].mxu0 %v669
    %v737 = vpop.f32.mrb[0].mxu0
    %v738 = vadd.f32 0.0, %v737
    %v739 = vpop.f32.mrb[0].mxu0
    %740 = vdwg.mxu0
    %v742 = vrot.slane %v738, 6
    %v744 = vadd.f32 %v134, %v742
    %v745 = vxor.u32 %v744, 2147483648
    %v746 = vmul.f32 %v745, 1.442695
    %v747 = vpow.pop %v746
    %v748 = vadd.f32 %v747, 1.0
    %v749 = vrcp.pop %v748
    %v750 = vmul.f32 1.0, %v749
    %v751 = vtanh.pop %v744
    %v753 = vrot.slane %v659, 6
    %v755 = vmul.f32 %v750, %v753
    %757 = vrot.lane.b32.xlu0 %v751, 64
    %v758 = vpop.permute.xlu0 %757
    %v760 = vmul.f32 %v750, %v758
    %762 = vrot.lane.b32.xlu0 %v760, 96
    %v763 = vpop.permute.xlu0 %762
    %v765 = vadd.f32 %v755, %v763
    %v766 = vtanh.pop %v765
    %768 = vrot.lane.b32.xlu0 %v766, 64
    %v769 = vpop.permute.xlu0 %768
    %v771 = vmul.f32 %v750, %v769
    %v773 = vrot.slane %v771, 2
    %774 = vrot.lane.b32.xlu0 %v773, 64
    %v775 = vpop.permute.xlu0 %774
    %v776 = vsel %vm143, %v775, 0
    %778 = vmatprep.subr.mxu0 0.0
    %779 = vmatpush1.msra.mxu0 %v137
    %780 = vmatprep.subr.mxu0 0.0
    %781 = vmatpush1.msra.mxu0 %v138
    %782 = vmatprep.subr.mxu0 0.0
    %783 = vmatpush1.msra.mxu0 %v139
    %784 = vmatprep.subr.mxu0 0.0
    %785 = vmatpush1.msra.mxu0 %v140
    %786 = vmatprep.subr.mxu0 0.0
    %787 = vmatpush1.msra.mxu0 0.0
    %788 = vmatprep.subr.mxu0 0.0
    %789 = vmatpush1.msra.mxu0 0.0
    %790 = vmatprep.subr.mxu0 0.0
    %791 = vmatpush1.msra.mxu0 0.0
    %792 = vmatprep.subr.mxu0 0.0
    %793 = vmatpush1.msra.mxu0 0.0
    %794 = vmatprep.subr.mxu0 0.0
    %795 = vmatpush1.msra.mxu0 0.0
    %796 = vmatprep.subr.mxu0 0.0
    %797 = vmatpush1.msra.mxu0 0.0
    %798 = vmatprep.subr.mxu0 0.0
    %799 = vmatpush1.msra.mxu0 0.0
    %800 = vmatprep.subr.mxu0 0.0
    %801 = vmatpush1.msra.mxu0 0.0
    %802 = vmatprep.subr.mxu0 0.0
    %803 = vmatpush1.msra.mxu0 0.0
    %804 = vmatprep.subr.mxu0 0.0
    %805 = vmatpush1.msra.mxu0 0.0
    %806 = vmatprep.subr.mxu0 0.0
    %807 = vmatpush1.msra.mxu0 0.0
    %808 = vmatprep.subr.mxu0 0.0
    %809 = vmatpush1.msra.mxu0 0.0
    %810 = vmatprep.subr.mxu0 0.0
    %811 = vmatpush1.msra.mxu0 0.0
    %812 = vmatprep.subr.mxu0 0.0
    %813 = vmatpush1.msra.mxu0 0.0
    %814 = vmatprep.subr.mxu0 0.0
    %815 = vmatpush1.msra.mxu0 0.0
    %816 = vmatprep.subr.mxu0 0.0
    %817 = vmatpush1.msra.mxu0 0.0
    %818 = vmatprep.subr.mxu0 0.0
    %819 = vmatpush1.msra.mxu0 0.0
    %820 = vmatprep.subr.mxu0 0.0
    %821 = vmatpush1.msra.mxu0 0.0
    %822 = vmatprep.subr.mxu0 0.0
    %823 = vmatpush1.msra.mxu0 0.0
    %824 = vmatprep.subr.mxu0 0.0
    %825 = vmatpush1.msra.mxu0 0.0
    %826 = vmatprep.subr.mxu0 0.0
    %827 = vmatpush1.msra.mxu0 0.0
    %828 = vmatprep.subr.mxu0 0.0
    %829 = vmatpush1.msra.mxu0 0.0
    %830 = vmatprep.subr.mxu0 0.0
    %831 = vmatpush1.msra.mxu0 0.0
    %832 = vmatprep.subr.mxu0 0.0
    %833 = vmatpush1.msra.mxu0 0.0
    %834 = vmatprep.subr.mxu0 0.0
    %835 = vmatpush1.msra.mxu0 0.0
    %836 = vmatprep.subr.mxu0 0.0
    %837 = vmatpush1.msra.mxu0 0.0
    %838 = vmatprep.subr.mxu0 0.0
    %839 = vmatpush1.msra.mxu0 0.0
    %840 = vmatprep.subr.mxu0 0.0
    %841 = vmatpush1.msra.mxu0 0.0
    %842 = vmatprep.mubr.f32.mxu0 0.0
    %843 = vmatmul.mubr.f32.gmra.mrb[0].mxu0 %v776
    %v844 = vpop.f32.mrb[0].mxu0
    %v845 = vadd.f32 0.0, %v844
    %v846 = vpop.f32.mrb[0].mxu0
    %847 = vdwg.mxu0
    %v849 = vrot.slane %v845, 4
    %v851 = vadd.f32 %v134, %v849
    %v852 = vxor.u32 %v851, 2147483648
    %v853 = vmul.f32 %v852, 1.442695
    %v854 = vpow.pop %v853
    %v855 = vadd.f32 %v854, 1.0
    %v856 = vrcp.pop %v855
    %v857 = vmul.f32 1.0, %v856
    %v858 = vtanh.pop %v851
    %v860 = vrot.slane %v765, 6
    %v862 = vmul.f32 %v857, %v860
    %864 = vrot.lane.b32.xlu0 %v858, 64
    %v865 = vpop.permute.xlu0 %864
    %v867 = vmul.f32 %v857, %v865
    %869 = vrot.lane.b32.xlu0 %v867, 96
    %v870 = vpop.permute.xlu0 %869
    %v872 = vadd.f32 %v862, %v870
    %v873 = vtanh.pop %v872
    %875 = vrot.lane.b32.xlu0 %v873, 64
    %v876 = vpop.permute.xlu0 %875
    %v878 = vmul.f32 %v857, %v876
    %v880 = vrot.slane %v878, 4
    %881 = vrot.lane.b32.xlu0 %v880, 64
    %v882 = vpop.permute.xlu0 %881
    %v883 = vsel %vm143, %v882, 0
    %885 = vmatprep.subr.mxu0 0.0
    %886 = vmatpush1.msra.mxu0 %v137
    %887 = vmatprep.subr.mxu0 0.0
    %888 = vmatpush1.msra.mxu0 %v138
    %889 = vmatprep.subr.mxu0 0.0
    %890 = vmatpush1.msra.mxu0 %v139
    %891 = vmatprep.subr.mxu0 0.0
    %892 = vmatpush1.msra.mxu0 %v140
    %893 = vmatprep.subr.mxu0 0.0
    %894 = vmatpush1.msra.mxu0 0.0
    %895 = vmatprep.subr.mxu0 0.0
    %896 = vmatpush1.msra.mxu0 0.0
    %897 = vmatprep.subr.mxu0 0.0
    %898 = vmatpush1.msra.mxu0 0.0
    %899 = vmatprep.subr.mxu0 0.0
    %900 = vmatpush1.msra.mxu0 0.0
    %901 = vmatprep.subr.mxu0 0.0
    %902 = vmatpush1.msra.mxu0 0.0
    %903 = vmatprep.subr.mxu0 0.0
    %904 = vmatpush1.msra.mxu0 0.0
    %905 = vmatprep.subr.mxu0 0.0
    %906 = vmatpush1.msra.mxu0 0.0
    %907 = vmatprep.subr.mxu0 0.0
    %908 = vmatpush1.msra.mxu0 0.0
    %909 = vmatprep.subr.mxu0 0.0
    %910 = vmatpush1.msra.mxu0 0.0
    %911 = vmatprep.subr.mxu0 0.0
    %912 = vmatpush1.msra.mxu0 0.0
    %913 = vmatprep.subr.mxu0 0.0
    %914 = vmatpush1.msra.mxu0 0.0
    %915 = vmatprep.subr.mxu0 0.0
    %916 = vmatpush1.msra.mxu0 0.0
    %917 = vmatprep.subr.mxu0 0.0
    %918 = vmatpush1.msra.mxu0 0.0
    %919 = vmatprep.subr.mxu0 0.0
    %920 = vmatpush1.msra.mxu0 0.0
    %921 = vmatprep.subr.mxu0 0.0
    %922 = vmatpush1.msra.mxu0 0.0
    %923 = vmatprep.subr.mxu0 0.0
    %924 = vmatpush1.msra.mxu0 0.0
    %925 = vmatprep.subr.mxu0 0.0
    %926 = vmatpush1.msra.mxu0 0.0
    %927 = vmatprep.subr.mxu0 0.0
    %928 = vmatpush1.msra.mxu0 0.0
    %929 = vmatprep.subr.mxu0 0.0
    %930 = vmatpush1.msra.mxu0 0.0
    %931 = vmatprep.subr.mxu0 0.0
    %932 = vmatpush1.msra.mxu0 0.0
    %933 = vmatprep.subr.mxu0 0.0
    %934 = vmatpush1.msra.mxu0 0.0
    %935 = vmatprep.subr.mxu0 0.0
    %936 = vmatpush1.msra.mxu0 0.0
    %937 = vmatprep.subr.mxu0 0.0
    %938 = vmatpush1.msra.mxu0 0.0
    %939 = vmatprep.subr.mxu0 0.0
    %940 = vmatpush1.msra.mxu0 0.0
    %941 = vmatprep.subr.mxu0 0.0
    %942 = vmatpush1.msra.mxu0 0.0
    %943 = vmatprep.subr.mxu0 0.0
    %944 = vmatpush1.msra.mxu0 0.0
    %945 = vmatprep.subr.mxu0 0.0
    %946 = vmatpush1.msra.mxu0 0.0
    %947 = vmatprep.subr.mxu0 0.0
    %948 = vmatpush1.msra.mxu0 0.0
    %949 = vmatprep.mubr.f32.mxu0 0.0
    %950 = vmatmul.mubr.f32.gmra.mrb[0].mxu0 %v883
    %v951 = vpop.f32.mrb[0].mxu0
    %v952 = vadd.f32 0.0, %v951
    %v953 = vpop.f32.mrb[0].mxu0
    %954 = vdwg.mxu0
    %v956 = vrot.slane %v952, 2
    %v958 = vadd.f32 %v134, %v956
    %v959 = vxor.u32 %v958, 2147483648
    %v960 = vmul.f32 %v959, 1.442695
    %v961 = vpow.pop %v960
    %v962 = vadd.f32 %v961, 1.0
    %v963 = vrcp.pop %v962
    %v964 = vmul.f32 1.0, %v963
    %v965 = vtanh.pop %v958
    %v967 = vrot.slane %v872, 6
    %v969 = vmul.f32 %v964, %v967
    %971 = vrot.lane.b32.xlu0 %v965, 64
    %v972 = vpop.permute.xlu0 %971
    %v974 = vmul.f32 %v964, %v972
    %976 = vrot.lane.b32.xlu0 %v974, 96
    %v977 = vpop.permute.xlu0 %976
    %v979 = vadd.f32 %v969, %v977
    %v980 = vtanh.pop %v979
    %982 = vrot.lane.b32.xlu0 %v980, 64
    %v983 = vpop.permute.xlu0 %982
    %v985 = vmul.f32 %v964, %v983
    %987 = vrot.lane.b32.xlu0 %v349, 96
    %v988 = vpop.permute.xlu0 %987
    %991 = vrot.lane.b32.xlu0 %v563, 32
    %v992 = vpop.permute.xlu0 %991
    %995 = vrot.lane.b32.xlu0 %v773, 96
    %v996 = vpop.permute.xlu0 %995
    %v1000 = vrot.slane %v985, 6
    %1001 = vrot.lane.b32.xlu0 %v1000, 32
    %v1002 = vpop.permute.xlu0 %1001
    %v1004 = vsel %vm143, %v244, %v988
    %vm1005 = vcmask 523264
    %v1006 = vsel %vm1005, %v1004, %v456
    %vm1007 = vcmask 785408
    %v1008 = vsel %vm1007, %v1006, %v992
    %v1009 = vsel %vm143, %v668, %v996
    %v1010 = vsel %vm1005, %v1009, %v880
    %v1011 = vsel %vm1007, %v1010, %v1002
    %v1014 = vcombine.low %v1008, %v1011
    %v1016 = vunpack.c.l.s4 1983009808
    %v1017 = vunpack.c.0.s8 %v1016
    %v1018 = vlaneseq
    %v1019 = vshrl.u32 %v1018, 7
    %v1020 = vsub.s32 %v1017, %v1019
    %v1021 = vrot.slane %v1014, %v1020
    %1023 = vst [vmem:[#allocation5] sm:$0xf] %v1021
    %v1024 = vrot.slane %v341, 2
    %1025 = vrot.lane.b32.xlu0 %v1024, 32
    %v1026 = vpop.permute.xlu0 %1025
    %v1028 = vrot.slane %v448, 4
    %1029 = vrot.lane.b32.xlu0 %v1028, 64
    %v1030 = vpop.permute.xlu0 %1029
    %1032 = vrot.lane.b32.xlu0 %v647, 96
    %v1033 = vpop.permute.xlu0 %1032
    %v1035 = vrot.slane %v765, 2
    %1036 = vrot.lane.b32.xlu0 %v1035, 32
    %v1037 = vpop.permute.xlu0 %1036
    %v1039 = vrot.slane %v872, 4
    %1040 = vrot.lane.b32.xlu0 %v1039, 64
    %v1041 = vpop.permute.xlu0 %1040
    %v1044 = vrot.slane %v979, 6
    %1045 = vrot.lane.b32.xlu0 %v1044, 96
    %v1046 = vpop.permute.xlu0 %1045
    %v1048 = vsel %vm143, %v235, %v1026
    %v1049 = vsel %vm1005, %v1048, %v1030
    %v1050 = vsel %vm1007, %v1049, %v1033
    %v1051 = vsel %vm143, %v659, %v1037
    %v1052 = vsel %vm1005, %v1051, %v1041
    %v1053 = vsel %vm1007, %v1052, %v1046
    %v1056 = vcombine.low %v1050, %v1053
    %v1058 = vunpack.c.l.s4 1983009808
    %v1059 = vunpack.c.0.s8 %v1058
    %v1060 = vlaneseq
    %v1061 = vshrl.u32 %v1060, 7
    %v1062 = vsub.s32 %v1059, %v1061
    %v1063 = vrot.slane %v1056, %v1062
    %1065 = vst [vmem:[#allocation6] sm:$0xf] %v1063
    // Predicated region
    $region30: #{tpu_custom_call.1} parent=1 // pred_check
      _
    $region31: #{tpu_custom_call.1} parent=1 // pred_check_branch
      %1067 = sbr.rel (0) target = $region33
    $region32: #{tpu_custom_call.1} parent=1 // pred_region
      %s1069 = ssub.s32 64, 64
      %1070 = vsyncadd [#allocation4], %s1069
      %s1072 = sshll.u32 [#allocation5], 4
      %s1073 = int_to_ptr.vmem [resolvable:$true] %s1072
      %1075 = dma.vmem_to_hbm [thread:$0]  %s1073, 64, %s6, [#allocation4]
    $region33: #{tpu_custom_call.1} parent=1 // pred_fallthru
      _
    // Predicated region
    $region34: #{tpu_custom_call.1} parent=1 // pred_check
      _
    $region35: #{tpu_custom_call.1} parent=1 // pred_check_branch
      %1077 = sbr.rel (0) target = $region37
    $region36: #{tpu_custom_call.1} parent=1 // pred_region
      %s1079 = ssub.s32 64, 64
      %1080 = vsyncadd [#allocation7], %s1079
      %s1082 = sshll.u32 [#allocation6], 4
      %s1083 = int_to_ptr.vmem [resolvable:$true] %s1082
      %1085 = dma.vmem_to_hbm [thread:$0]  %s1083, 64, %s7, [#allocation7]
    $region37: #{tpu_custom_call.1} parent=1 // pred_fallthru
      _
    // Predicated region
    $region38: #{tpu_custom_call.1} parent=1 // pred_check
      _
    $region39: #{tpu_custom_call.1} parent=1 // pred_check_branch
      %1087 = sbr.rel (0) target = $region41
    $region40: #{tpu_custom_call.1} parent=1 // pred_region
      %1088 = dma.done [#allocation4], 64
    $region41: #{tpu_custom_call.1} parent=1 // pred_fallthru
      _
    // Predicated region
    $region42: #{tpu_custom_call.1} parent=1 // pred_check
      _
    $region43: #{tpu_custom_call.1} parent=1 // pred_check_branch
      %1090 = sbr.rel (0) target = $region45
    $region44: #{tpu_custom_call.1} parent=1 // pred_region
      %1091 = dma.done [#allocation7], 64
    $region45: #{tpu_custom_call.1} parent=1 // pred_fallthru
      _
    %1092 = vsyncpa [#allocation3], 1
    %1093 = vsyncpa [#allocation4], 1
    %1094 = vsyncpa [#allocation7], 1

</llo_original>
